<compile_context>
chip_gen: v7x
topology: tpu7x:2x2x1
jax: 0.10.0
libtpu: 0.0.40
codegen_flags: <defaults>
</compile_context>

<pallas_src>
import jax
import jax.numpy as jnp
from jax.experimental import pallas as pl
from jax.experimental.pallas import tpu as pltpu


def _round_up(a, b):
    return (a + b - 1) // b * b


def _disc_stn_kernel(x_ref, w0_ref, b0_ref, w1_ref, b1_ref, disc_ref):
    # conv0 (1x1 conv == dense) + ReLU.  bf16 MXU matmul, f32 accumulation.
    e0 = jnp.dot(x_ref[...], w0_ref[...], preferred_element_type=jnp.float32)
    e0 = jnp.maximum(e0 + b0_ref[...], 0.0)

    # conv1 (1x1 conv, f_dim -> 1) + Sigmoid (exp on the EUP).
    logits = jnp.dot(e0.astype(w1_ref.dtype), w1_ref[...],
                     preferred_element_type=jnp.float32) + b1_ref[...]
    # TODO(synk): the output is 1 lane wide, so stores are masked; if this kernel
    # ever sits on a hot path with very large N, emit a lane-dense [1, TILE_N]
    # slab instead of a column to avoid wasting ~99% of the store slot.
    disc_ref[...] = (1.0 / (1.0 + jnp.exp(-logits))).astype(disc_ref.dtype)


def discriminator_stn(x, params, *, tile_n=512):
    """x: any array whose element count is divisible by 6 (PyTorch does
    x.view([-1, 6, 1, 1])).  Returns disc of shape [N, 1, 1, 1] (float32)."""
    w0, b0, w1, b1 = params
    f_dim = w0.shape[1]

    x2d = x.reshape(-1, 6)
    n = x2d.shape[0]

    # Row tile: >=512 rows when the batch is big (amortizes ~0.35us/step grid
    # overhead), otherwise the whole (8-row aligned) batch in a single block.
    tile_n = min(tile_n, _round_up(n, 8))
    n_pad = _round_up(n, tile_n)

    # bf16 inputs/weights halve HBM read traffic and use the native MXU path;
    # biases and accumulation stay f32.
    x2d = x2d.astype(jnp.bfloat16)
    if n_pad != n:
        x2d = jnp.pad(x2d, ((0, n_pad - n), (0, 0)))
    w0 = w0.astype(jnp.bfloat16)
    w1 = w1.astype(jnp.bfloat16)
    b0 = b0.astype(jnp.float32)
    b1 = b1.astype(jnp.float32)

    num_tiles = n_pad // tile_n

    cost = pl.CostEstimate(
        flops=n_pad * (2 * 6 * f_dim + 2 * f_dim * 1),
        transcendentals=n_pad,                                   # one exp per row
        bytes_accessed=(n_pad * (6 * 2 + 4)                      # x (bf16) + disc (f32)
                        + (6 * f_dim + f_dim) * 2 + (f_dim + 1) * 4),
    )

    disc2d = pl.pallas_call(
        _disc_stn_kernel,
        out_shape=jax.ShapeDtypeStruct((n_pad, 1), jnp.float32),
        grid_spec=pltpu.PrefetchScalarGridSpec(
            num_scalar_prefetch=0,
            grid=(num_tiles,),
            in_specs=[
                pl.BlockSpec((tile_n, 6), lambda i: (i, 0)),   # x tile (pipelined)
                pl.BlockSpec((6, f_dim), lambda i: (0, 0)),    # W0 (VMEM-resident)
                pl.BlockSpec((1, f_dim), lambda i: (0, 0)),    # b0 (VMEM-resident)
                pl.BlockSpec((f_dim, 1), lambda i: (0, 0)),    # W1 (VMEM-resident)
                pl.BlockSpec((1, 1), lambda i: (0, 0)),        # b1 (VMEM-resident)
            ],
            out_specs=pl.BlockSpec((tile_n, 1), lambda i: (i, 0)),
        ),
        compiler_params=pltpu.CompilerParams(
            dimension_semantics=("parallel",),   # shard row tiles across TCs (v7x)
            vmem_limit_bytes=16 * 1024 * 1024,   # per-step footprint << 1 MiB
        ),
        cost_estimate=cost,
    )(x2d, w0, b0, w1, b1)

    # Drop padding; back to PyTorch NCHW conv output shape [N, 1, 1, 1].
    return disc2d[:n].reshape(n, 1, 1, 1)


def init_params(key, f_dim):
    """Deterministic synthetic parameters.  PyTorch conv weights are
    [out, in, 1, 1]; we store them transposed as [in, out] for right-multiply."""
    k0, k1, k2, k3 = jax.random.split(key, 4)
    w0 = jax.random.normal(k0, (6, f_dim), jnp.float32) * 0.1
    b0 = jax.random.normal(k1, (1, f_dim), jnp.float32) * 0.1
    w1 = jax.random.normal(k2, (f_dim, 1), jnp.float32) * 0.1
    b1 = jax.random.normal(k3, (1, 1), jnp.float32) * 0.1
    return (w0, b0, w1, b1)


def _reference(x, params):
    w0, b0, w1, b1 = params
    x2d = x.reshape(-1, 6).astype(jnp.float32)
    e0 = jnp.maximum(x2d @ w0 + b0, 0.0)
    disc = 1.0 / (1.0 + jnp.exp(-(e0 @ w1 + b1)))
    return disc.reshape(-1, 1, 1, 1)


if __name__ == "__main__":
    # opt.gf_dim = 32; batch of 8 six-dim STN parameter vectors.
    f_dim, batch = 32, 8
    key = jax.random.PRNGKey(0)
    kx, kp = jax.random.split(key)
    x = jax.random.normal(kx, (batch, 6), jnp.float32)
    params = init_params(kp, f_dim)

    disc = discriminator_stn(x, params)
    jax.block_until_ready(disc)

    disc_ref = _reference(x, params)
    assert disc.shape == (batch, 1, 1, 1)
    # bf16 matmul inputs (f32 accumulation) -> relaxed tolerance vs f32 reference.
    assert jnp.allclose(disc, disc_ref, atol=2e-2), "disc mismatch"
    print("KERNEL_OK")
</pallas_src>

<mosaic_0001>
module attributes {stable_mosaic.version = 11 : i64} {
  func.func @_disc_stn_kernel(%arg0: i32, %arg1: memref<8x6xbf16, #tpu.memory_space<vmem>>, %arg2: memref<6x32xbf16, #tpu.memory_space<vmem>>, %arg3: memref<1x32xf32, #tpu.memory_space<vmem>>, %arg4: memref<32x1xbf16, #tpu.memory_space<vmem>>, %arg5: memref<1x1xf32, #tpu.memory_space<vmem>>, %arg6: memref<8x1xf32, #tpu.memory_space<vmem>>) attributes {dimension_semantics = [#tpu.dimension_semantics<parallel>], iteration_bounds = array<i64: 1>, scalar_prefetch = 0 : i64, scratch_operands = 0 : i64, tpu.core_type = #tpu.core_type<tc>, window_params = [{transform_indices = @transform_0, window_bounds = array<i64: 8, 6>}, {pipeline_mode = #tpu.pipeline_mode<synchronous>, transform_indices = @transform_1, window_bounds = array<i64: 6, 32>}, {pipeline_mode = #tpu.pipeline_mode<synchronous>, transform_indices = @transform_2, window_bounds = array<i64: 1, 32>}, {pipeline_mode = #tpu.pipeline_mode<synchronous>, transform_indices = @transform_3, window_bounds = array<i64: 32, 1>}, {pipeline_mode = #tpu.pipeline_mode<synchronous>, transform_indices = @transform_4, window_bounds = array<i64: 1, 1>}, {transform_indices = @transform_5, window_bounds = array<i64: 8, 1>}]} {
    %c0 = arith.constant 0 : index
    %c0_0 = arith.constant 0 : index
    %0 = vector.load %arg1[%c0, %c0_0] : memref<8x6xbf16, #tpu.memory_space<vmem>>, vector<8x6xbf16>
    %c0_1 = arith.constant 0 : index
    %c0_2 = arith.constant 0 : index
    %1 = vector.load %arg2[%c0_1, %c0_2] : memref<6x32xbf16, #tpu.memory_space<vmem>>, vector<6x32xbf16>
    %cst = arith.constant dense<0.000000e+00> : vector<8x32xf32>
    %2 = tpu.matmul %0, %1, %cst {dimension_numbers = #tpu.dot_dimension_numbers<[1], [0], [0], [1], [0, 0, 1, 1], [], []>} : vector<8x6xbf16>, vector<6x32xbf16>, vector<8x32xf32> -> vector<8x32xf32>
    %c0_3 = arith.constant 0 : index
    %c0_4 = arith.constant 0 : index
    %3 = vector.load %arg3[%c0_3, %c0_4] : memref<1x32xf32, #tpu.memory_space<vmem>>, vector<1x32xf32>
    %4 = vector.broadcast %3 : vector<1x32xf32> to vector<8x32xf32>
    %5 = arith.addf %2, %4 : vector<8x32xf32>
    %cst_5 = arith.constant 0.000000e+00 : f32
    %6 = vector.broadcast %cst_5 : f32 to vector<8x32xf32>
    %7 = arith.maximumf %5, %6 : vector<8x32xf32>
    %8 = arith.truncf %7 : vector<8x32xf32> to vector<8x32xbf16>
    %c0_6 = arith.constant 0 : index
    %c0_7 = arith.constant 0 : index
    %9 = vector.load %arg4[%c0_6, %c0_7] : memref<32x1xbf16, #tpu.memory_space<vmem>>, vector<32x1xbf16>
    %cst_8 = arith.constant dense<0.000000e+00> : vector<8x1xf32>
    %10 = tpu.matmul %8, %9, %cst_8 {dimension_numbers = #tpu.dot_dimension_numbers<[1], [0], [0], [1], [0, 0, 1, 1], [], []>} : vector<8x32xbf16>, vector<32x1xbf16>, vector<8x1xf32> -> vector<8x1xf32>
    %c0_9 = arith.constant 0 : index
    %c0_10 = arith.constant 0 : index
    %11 = vector.load %arg5[%c0_9, %c0_10] : memref<1x1xf32, #tpu.memory_space<vmem>>, vector<1x1xf32>
    %12 = vector.broadcast %11 : vector<1x1xf32> to vector<8x1xf32>
    %13 = arith.addf %10, %12 : vector<8x1xf32>
    %cst_11 = arith.constant 0.000000e+00 : f32
    %14 = vector.broadcast %cst_11 : f32 to vector<8x1xf32>
    %15 = arith.subf %14, %13 : vector<8x1xf32>
    %16 = math.exp %15 : vector<8x1xf32>
    %cst_12 = arith.constant 1.000000e+00 : f32
    %17 = vector.broadcast %cst_12 : f32 to vector<8x1xf32>
    %18 = arith.addf %17, %16 : vector<8x1xf32>
    %cst_13 = arith.constant 1.000000e+00 : f32
    %19 = vector.broadcast %cst_13 : f32 to vector<8x1xf32>
    %20 = arith.divf %19, %18 : vector<8x1xf32>
    %c0_14 = arith.constant 0 : index
    %c0_15 = arith.constant 0 : index
    %21 = vector.load %arg6[%c0_14, %c0_15] : memref<8x1xf32, #tpu.memory_space<vmem>>, vector<8x1xf32>
    tpu.vector_store %arg6[%c0_14, %c0_15], %20 {strides = array<i32>} : memref<8x1xf32, #tpu.memory_space<vmem>>, vector<8x1xf32>,
    return
  }
  func.func @transform_0(%arg0: i32) -> (i32, i32) {
    %c0_i32 = arith.constant 0 : i32
    %c0_i32_0 = arith.constant 0 : i32
    return %arg0, %c0_i32 : i32, i32
  }
  func.func @transform_1(%arg0: i32) -> (i32, i32) {
    %c0_i32 = arith.constant 0 : i32
    %c0_i32_0 = arith.constant 0 : i32
    %c0_i32_1 = arith.constant 0 : i32
    return %c0_i32, %c0_i32_0 : i32, i32
  }
  func.func @transform_2(%arg0: i32) -> (i32, i32) {
    %c0_i32 = arith.constant 0 : i32
    %c0_i32_0 = arith.constant 0 : i32
    %c0_i32_1 = arith.constant 0 : i32
    return %c0_i32, %c0_i32_0 : i32, i32
  }
  func.func @transform_3(%arg0: i32) -> (i32, i32) {
    %c0_i32 = arith.constant 0 : i32
    %c0_i32_0 = arith.constant 0 : i32
    %c0_i32_1 = arith.constant 0 : i32
    return %c0_i32, %c0_i32_0 : i32, i32
  }
  func.func @transform_4(%arg0: i32) -> (i32, i32) {
    %c0_i32 = arith.constant 0 : i32
    %c0_i32_0 = arith.constant 0 : i32
    %c0_i32_1 = arith.constant 0 : i32
    return %c0_i32, %c0_i32_0 : i32, i32
  }
  func.func @transform_5(%arg0: i32) -> (i32, i32) {
    %c0_i32 = arith.constant 0 : i32
    %c0_i32_0 = arith.constant 0 : i32
    return %arg0, %c0_i32 : i32, i32
  }
}

</mosaic_0001>

<llo_original>
// kernel: tpu_custom_call.1
$region0: #{tpu_custom_call.1}
  #allocation0 [shape = 'u32[]', space=smem, size = 0x4, offset = 0x4, fixed_abs, tag = 'smem constant byte address 0x4 - core index']
  #allocation1 [shape = 'u32[144,128]{1,0:T(1,128)}', space=vmem, size = 0x12000, scoped, tag = 'internal scratch']
  #allocation2 [shape = 'f32[1,1]{1,0:T(1,128)S(1)}', space=vmem, size = 0x200, scoped, tag = 'scoped memory for tpu_custom_call.1']
  %s0 = inlined_call_operand.vmem [shape: bf16[8,6], index: 0, kind: input, shape index: {}]
  %s1 = inlined_call_operand.vmem [shape: bf16[6,32], index: 1, kind: input, shape index: {}]
  %s2 = inlined_call_operand.vmem [shape: f32[1,32], index: 2, kind: input, shape index: {}]
  %s3 = inlined_call_operand.vmem [shape: bf16[32,1], index: 3, kind: input, shape index: {}]
  %s4 = inlined_call_operand.<no memory space> [shape: f32[1,1], index: 4, kind: input, shape index: {}]
  %s5 = inlined_call_operand.vmem [shape: f32[8,1], index: 5, kind: output, shape index: {}]
  %s6 = sld [smem:[#allocation0]]
  $region30: #{tpu_custom_call.1} parent=0
    _
  %s8 = ssub.s32 1, %s6
  %s9 = scalar_select 0, %s8, %s6
  %v10 = vstv %s4
  %11 = vst [vmem:[#allocation2] sm:$0x1] %v10
  // Predicated region
  $region2: #{tpu_custom_call.1} parent=0 // pred_check
    _
  $region3: #{tpu_custom_call.1} parent=0 // pred_check_branch
    %13 = sbr.rel (0) target = $region5
  $region4: #{tpu_custom_call.1} parent=0 // pred_region
    _
  $region5: #{tpu_custom_call.1} parent=0 // pred_fallthru
    _
  // Predicated region
  $region6: #{tpu_custom_call.1} parent=0 // pred_check
    _
  $region7: #{tpu_custom_call.1} parent=0 // pred_check_branch
    %15 = sbr.rel (0) target = $region9
  $region8: #{tpu_custom_call.1} parent=0 // pred_region
    _
  $region9: #{tpu_custom_call.1} parent=0 // pred_fallthru
    _
  // Predicated region
  $region10: #{tpu_custom_call.1} parent=0 // pred_check
    _
  $region11: #{tpu_custom_call.1} parent=0 // pred_check_branch
    %17 = sbr.rel (0) target = $region13
  $region12: #{tpu_custom_call.1} parent=0 // pred_region
    _
  $region13: #{tpu_custom_call.1} parent=0 // pred_fallthru
    _
  // Predicated region
  $region14: #{tpu_custom_call.1} parent=0 // pred_check
    _
  $region15: #{tpu_custom_call.1} parent=0 // pred_check_branch
    %19 = sbr.rel (0) target = $region17
  $region16: #{tpu_custom_call.1} parent=0 // pred_region
    _
  $region17: #{tpu_custom_call.1} parent=0 // pred_fallthru
    _
  // Predicated region
  $region18: #{tpu_custom_call.1} parent=0 // pred_check
    _
  $region19: #{tpu_custom_call.1} parent=0 // pred_check_branch
    %21 = sbr.rel (0) target = $region21
  $region20: #{tpu_custom_call.1} parent=0 // pred_region
    _
  $region21: #{tpu_custom_call.1} parent=0 // pred_fallthru
    _
  %v23 = vld [vmem:[%s0] sm:$0xf]
  %v24 = vld [vmem:[%s1] sm:$0x7]
  %v25 = vld [vmem:[%s2] sm:$0x1]
  %v27 = vlaneseq
  %v28 = vshrl.u32 %v27, 7
  %v29 = vsub.s32 0, %v28
  %v30 = vrot.slane %v25, %v29
  %vm32 = vcmask 48128
  %v34 = vsel %vm32, %v23, 0
  %vm36 = vcmask 1042432
  %v38 = vsel %vm36, %v24, 0
  %40 = vmatprep.subr.bf16.mxu0 0
  %41 = vmatpush1.bf16.msra.mxu0 %v38
  %42 = vmatprep.subr.bf16.mxu0 0
  %43 = vmatpush1.bf16.msra.mxu0 0
  %44 = vmatprep.subr.bf16.mxu0 0
  %45 = vmatpush1.bf16.msra.mxu0 0
  %46 = vmatprep.subr.bf16.mxu0 0
  %47 = vmatpush1.bf16.msra.mxu0 0
  %48 = vmatprep.subr.bf16.mxu0 0
  %49 = vmatpush1.bf16.msra.mxu0 0
  %50 = vmatprep.subr.bf16.mxu0 0
  %51 = vmatpush1.bf16.msra.mxu0 0
  %52 = vmatprep.subr.bf16.mxu0 0
  %53 = vmatpush1.bf16.msra.mxu0 0
  %54 = vmatprep.subr.bf16.mxu0 0
  %55 = vmatpush1.bf16.msra.mxu0 0
  %56 = vmatprep.subr.bf16.mxu0 0
  %57 = vmatpush1.bf16.msra.mxu0 0
  %58 = vmatprep.subr.bf16.mxu0 0
  %59 = vmatpush1.bf16.msra.mxu0 0
  %60 = vmatprep.subr.bf16.mxu0 0
  %61 = vmatpush1.bf16.msra.mxu0 0
  %62 = vmatprep.subr.bf16.mxu0 0
  %63 = vmatpush1.bf16.msra.mxu0 0
  %64 = vmatprep.subr.bf16.mxu0 0
  %65 = vmatpush1.bf16.msra.mxu0 0
  %66 = vmatprep.subr.bf16.mxu0 0
  %67 = vmatpush1.bf16.msra.mxu0 0
  %68 = vmatprep.subr.bf16.mxu0 0
  %69 = vmatpush1.bf16.msra.mxu0 0
  %70 = vmatprep.subr.bf16.mxu0 0
  %71 = vmatpush1.bf16.msra.mxu0 0
  %72 = vmatprep.mubr.bf16.mxu0 0
  %73 = vmatmul.mubr.bf16.gmra.mrb[0].mxu0 %v34
  %v74 = vpop.f32.mrb[0].mxu0
  %v75 = vadd.f32 %v30, %v74
  %v76 = vpop.f32.mrb[0].mxu0
  %v77 = vpop.f32.mrb[0].mxu0
  %v78 = vpop.f32.mrb[0].mxu0
  %79 = vdwg.mxu0
  %v80 = vmax.f32 %v75, 0.0
  %v81 = vpack.c.bf16 %v80, %v80
  %v82 = vld [vmem:[%s3] sm:$0xf]
  %v83 = vld [vmem:[%s3 + $0x4] sm:$0xf]
  %v84 = vld [vmem:[%s3 + $0x8] sm:$0xf]
  %v85 = vld [vmem:[%s3 + $0xc] sm:$0xf]
  %v86 = vld [vmem:[#allocation2] sm:$0x1]
  %v88 = vlaneseq
  %v89 = vshrl.u32 %v88, 7
  %v90 = vsub.s32 0, %v89
  %v91 = vrot.slane %v86, %v90
  %v97 = vunpack.c.l.b16 %v82
  %v98 = vunpack.c.l.b16 %v83
  %v99 = vunpack.c.l.b16 %v84
  %v100 = vunpack.c.l.b16 %v85
  %v101 = vpack.c.b16 %v98, %v97
  %v102 = vpack.c.b16 %v100, %v99
  %vm105 = vcmask 261120
  %v107 = vsel %vm105, %v81, 0
  %109 = vmatprep.subr.bf16.mxu0 0
  %110 = vmatpush1.bf16.msra.mxu0 %v101
  %111 = vmatprep.subr.bf16.mxu0 0
  %112 = vmatpush1.bf16.msra.mxu0 %v102
  %113 = vmatprep.subr.bf16.mxu0 0
  %114 = vmatpush1.bf16.msra.mxu0 0
  %115 = vmatprep.subr.bf16.mxu0 0
  %116 = vmatpush1.bf16.msra.mxu0 0
  %117 = vmatprep.subr.bf16.mxu0 0
  %118 = vmatpush1.bf16.msra.mxu0 0
  %119 = vmatprep.subr.bf16.mxu0 0
  %120 = vmatpush1.bf16.msra.mxu0 0
  %121 = vmatprep.subr.bf16.mxu0 0
  %122 = vmatpush1.bf16.msra.mxu0 0
  %123 = vmatprep.subr.bf16.mxu0 0
  %124 = vmatpush1.bf16.msra.mxu0 0
  %125 = vmatprep.subr.bf16.mxu0 0
  %126 = vmatpush1.bf16.msra.mxu0 0
  %127 = vmatprep.subr.bf16.mxu0 0
  %128 = vmatpush1.bf16.msra.mxu0 0
  %129 = vmatprep.subr.bf16.mxu0 0
  %130 = vmatpush1.bf16.msra.mxu0 0
  %131 = vmatprep.subr.bf16.mxu0 0
  %132 = vmatpush1.bf16.msra.mxu0 0
  %133 = vmatprep.subr.bf16.mxu0 0
  %134 = vmatpush1.bf16.msra.mxu0 0
  %135 = vmatprep.subr.bf16.mxu0 0
  %136 = vmatpush1.bf16.msra.mxu0 0
  %137 = vmatprep.subr.bf16.mxu0 0
  %138 = vmatpush1.bf16.msra.mxu0 0
  %139 = vmatprep.subr.bf16.mxu0 0
  %140 = vmatpush1.bf16.msra.mxu0 0
  %141 = vmatprep.mubr.bf16.mxu0 0
  %142 = vmatmul.mubr.bf16.gmra.mrb[0].mxu0 %v107
  %v143 = vpop.f32.mrb[0].mxu0
  %v144 = vadd.f32 %v91, %v143
  %v145 = vpop.f32.mrb[0].mxu0
  %v146 = vpop.f32.mrb[0].mxu0
  %v147 = vpop.f32.mrb[0].mxu0
  %148 = vdwg.mxu0
  %v149 = vsub.f32 0.0, %v144
  %v150 = vmul.f32 %v149, 1.442695
  %v151 = vpow.pop %v150
  %v152 = vadd.f32 %v151, 1.0
  %v153 = vrcp.pop %v152
  %v154 = vmul.f32 1.0, %v153
  %vm155 = vcmask 7168
  %156 = vst.msk [vmem:[%s5] sm:$0xff] %vm155, %v154
  // Predicated region
  $region22: #{tpu_custom_call.1} parent=0 // pred_check
    _
  $region23: #{tpu_custom_call.1} parent=0 // pred_check_branch
    %158 = sbr.rel (0) target = $region25
  $region24: #{tpu_custom_call.1} parent=0 // pred_region
    _
  $region25: #{tpu_custom_call.1} parent=0 // pred_fallthru
    _
  // Predicated region
  $region26: #{tpu_custom_call.1} parent=0 // pred_check
    _
  $region27: #{tpu_custom_call.1} parent=0 // pred_check_branch
    %160 = sbr.rel (0) target = $region29
  $region28: #{tpu_custom_call.1} parent=0 // pred_region
    _
  $region29: #{tpu_custom_call.1} parent=0 // pred_fallthru
    _

</llo_original>
